<compile_context>
chip_gen: v7x
topology: tpu7x:2x2x1
jax: 0.10.0
libtpu: 0.0.40
codegen_flags: <defaults>
</compile_context>

<pallas_src>
import functools

import jax
import jax.numpy as jnp
from jax.experimental import pallas as pl
from jax.experimental.pallas import tpu as pltpu


def _round_up(x, m):
    return (x + m - 1) // m * m


def _ceil_div(a, b):
    return -(-a // b)


def _choose_batch_tiling(batch, kp, target_rows):
    """Pick b_blk (batches per grid step) so b_blk*kp ~= target_rows, with at
    least two grid steps when batch >= 2 (keeps the second v7x TC busy)."""
    b_blk = max(1, target_rows // kp)
    b_blk = min(b_blk, batch)
    n_tiles = _ceil_div(batch, b_blk)
    if n_tiles < 2 and batch >= 2:
        b_blk = _ceil_div(batch, 2)
        n_tiles = _ceil_div(batch, b_blk)
    return b_blk, n_tiles


def _attention_kernel(v_ref, q_ref, mask_ref, wv_ref, bv_ref, wq_ref, bq_ref,
                      wl_ref, bl_ref, p_ref, logits_ref, *,
                      valid_k, compute_dtype):
    b_blk, glimpses, kp = p_ref.shape
    hp = wv_ref.shape[1]
    f32 = jnp.float32
    cd = compute_dtype

    # --- weight-normed Linear + ReLU projections (bf16 MXU, f32 accumulate) --
    v_proj = jnp.dot(v_ref[...].astype(cd), wv_ref[...],
                     preferred_element_type=f32)
    v_proj = jnp.maximum(v_proj + bv_ref[...], 0.0)          # [M, hp]     f32

    q_in = q_ref[...][:, 0, :]                               # [b_blk, dqp]
    q_proj = jnp.dot(q_in.astype(cd), wq_ref[...],
                     preferred_element_type=f32)
    q_proj = jnp.maximum(q_proj + bq_ref[...], 0.0)          # [b_blk, hp] f32

    # --- final linear fused with the q broadcast as a batched MXU contraction
    #     logits[b,g,k] = sum_h (q_proj[b,h] * wl[g,h]) * v_proj[b,k,h] + bl[g]
    qwl = q_proj[:, None, :] * wl_ref[...][None, :, :]       # [b_blk,G,hp] f32
    v3 = v_proj.reshape(b_blk, kp, hp)                       # free regroup
    logits = jnp.einsum("bgh,bkh->bgk", qwl, v3,
                        preferred_element_type=f32)          # [b_blk,G,kp]
    logits = logits + bl_ref[...]

    # --- multiplicative mask (reference semantics) + softmax over K (lanes) --
    logits = logits * mask_ref[...]                          # mask: [b_blk,1,kp]
    k_idx = jax.lax.broadcasted_iota(jnp.int32, (1, 1, kp), 2)
    soft_in = jnp.where(k_idx < valid_k, logits, -1e30)      # drop K padding
    m_max = jnp.max(soft_in, axis=-1, keepdims=True)
    e = jnp.exp(soft_in - m_max)
    denom = jnp.sum(e, axis=-1, keepdims=True)
    p = e * pl.reciprocal(denom, approx=True)

    p_ref[...] = p.astype(p_ref.dtype)
    logits_ref[...] = logits.astype(logits_ref.dtype)


@functools.partial(jax.jit, static_argnames=("compute_dtype", "block_rows"))
def attention_forward(v, v_mask, q, params, *, compute_dtype=jnp.bfloat16,
                      block_rows=512):
    """params: dict of effective (weight-norm applied) weights, feature-last."""
    B, K, v_dim = v.shape
    q_dim = q.shape[-1]
    hid = params["wv"].shape[1]
    G = params["wl"].shape[1]

    f32 = jnp.float32
    cd = compute_dtype

    dvp = _round_up(v_dim, 128)
    dqp = _round_up(q_dim, 128)
    hp = _round_up(hid, 128)
    kp = _round_up(K, 8)

    # v is the dominant HBM stream: only pad/copy it when the feature dim is
    # not lane-aligned or K is not sublane-aligned.  Otherwise feed it as-is
    # (f32) and cast to bf16 inside the kernel.
    if dvp == v_dim and kp == K:
        v2 = v.reshape(B * K, v_dim)
    else:
        v_p = jnp.zeros((B, kp, dvp), cd).at[:, :K, :v_dim].set(v.astype(cd))
        v2 = v_p.reshape(B * kp, dvp)

    # Zero-padding is exact: padded V/Q columns meet zero weight rows; padded
    # hidden columns have zero weights and biases (ReLU keeps them at 0);
    # padded K rows are masked out of the softmax inside the kernel.
    q_p = jnp.zeros((B, 1, dqp), cd).at[:, 0, :q_dim].set(q.astype(cd))
    mask_p = jnp.zeros((B, 1, kp), f32).at[:, 0, :K].set(v_mask.astype(f32))

    wv_p = jnp.zeros((dvp, hp), cd).at[:v_dim, :hid].set(params["wv"].astype(cd))
    wq_p = jnp.zeros((dqp, hp), cd).at[:q_dim, :hid].set(params["wq"].astype(cd))
    bv_p = jnp.zeros((1, hp), f32).at[:, :hid].set(params["bv"].astype(f32))
    bq_p = jnp.zeros((1, hp), f32).at[:, :hid].set(params["bq"].astype(f32))
    # Final layer is tiny -> keep f32; stored [G, hp] so qwl = q_proj * wl.
    wl_p = jnp.zeros((G, hp), f32).at[:, :hid].set(params["wl"].T.astype(f32))
    bl_p = params["bl"].astype(f32).reshape(1, G, 1)

    b_blk, n_tiles = _choose_batch_tiling(B, kp, block_rows)
    m_blk = b_blk * kp

    kernel = functools.partial(_attention_kernel, valid_k=K, compute_dtype=cd)

    out_shapes = (
        jax.ShapeDtypeStruct((B, G, kp), f32),         # softmax over K
        jax.ShapeDtypeStruct((B, G, kp), f32),         # masked logits
    )

    grid_spec = pltpu.PrefetchScalarGridSpec(
        num_scalar_prefetch=0,
        grid=(n_tiles,),
        in_specs=[
            pl.BlockSpec((m_blk, dvp), lambda i: (i, 0)),          # v rows
            pl.BlockSpec((b_blk, 1, dqp), lambda i: (i, 0, 0)),    # q
            pl.BlockSpec((b_blk, 1, kp), lambda i: (i, 0, 0)),     # v_mask
            pl.BlockSpec((dvp, hp), lambda i: (0, 0)),             # Wv
            pl.BlockSpec((1, hp), lambda i: (0, 0)),               # bv
            pl.BlockSpec((dqp, hp), lambda i: (0, 0)),             # Wq
            pl.BlockSpec((1, hp), lambda i: (0, 0)),               # bq
            pl.BlockSpec((G, hp), lambda i: (0, 0)),               # Wl^T
            pl.BlockSpec((1, G, 1), lambda i: (0, 0, 0)),          # bl
        ],
        out_specs=[
            pl.BlockSpec((b_blk, G, kp), lambda i: (i, 0, 0)),
            pl.BlockSpec((b_blk, G, kp), lambda i: (i, 0, 0)),
        ],
    )

    p_pad, logits_pad = pl.pallas_call(
        kernel,
        out_shape=out_shapes,
        grid_spec=grid_spec,
        compiler_params=pltpu.CompilerParams(
            dimension_semantics=("parallel",),
            vmem_limit_bytes=48 * 1024 * 1024),
    )(v2, q_p, mask_p, wv_p, bv_p, wq_p, bq_p, wl_p, bl_p)

    # [B, G, Kp] -> [B, K, G] (module layout); drop the K padding lanes.
    p_out = jnp.transpose(p_pad[:, :, :K], (0, 2, 1))
    logits_out = jnp.transpose(logits_pad[:, :, :K], (0, 2, 1))
    return p_out, logits_out


def _weight_norm_effective(raw_v, g):
    """weight_norm(dim=None): W = g * V / ||V||_F  (g is a scalar)."""
    return g * raw_v / jnp.sqrt(jnp.sum(raw_v * raw_v))


def init_params(key, v_dim, q_dim, hid_dim, glimpses):
    """Deterministic synthetic parameters (feature-last effective weights)."""
    ks = jax.random.split(key, 9)
    vv = jax.random.normal(ks[0], (v_dim, hid_dim), jnp.float32) * 0.1
    vq = jax.random.normal(ks[1], (q_dim, hid_dim), jnp.float32) * 0.1
    vl = jax.random.normal(ks[2], (hid_dim, glimpses), jnp.float32) * 0.1
    gv = 1.0 + 0.1 * jax.random.normal(ks[3], (), jnp.float32)
    gq = 1.0 + 0.1 * jax.random.normal(ks[4], (), jnp.float32)
    gl = 1.0 + 0.1 * jax.random.normal(ks[5], (), jnp.float32)
    return {
        "wv": _weight_norm_effective(vv, gv),
        "bv": 0.05 * jax.random.normal(ks[6], (1, hid_dim), jnp.float32),
        "wq": _weight_norm_effective(vq, gq),
        "bq": 0.05 * jax.random.normal(ks[7], (1, hid_dim), jnp.float32),
        "wl": _weight_norm_effective(vl, gl),
        "bl": 0.05 * jax.random.normal(ks[8], (1, glimpses), jnp.float32),
    }


def reference_forward(v, v_mask, q, params, compute_dtype=jnp.bfloat16):
    """Pure-JAX reference matching the PyTorch forward (dropout = eval mode),
    with the same dtype policy as the kernel (bf16 MXU inputs, f32 accumulate,
    f32 elementwise / final layer)."""
    f32 = jnp.float32
    cd = compute_dtype
    v_proj = jnp.maximum(
        jnp.dot(v.astype(cd), params["wv"].astype(cd),
                preferred_element_type=f32) + params["bv"], 0.0)     # [B,K,H]
    q_proj = jnp.maximum(
        jnp.dot(q.astype(cd), params["wq"].astype(cd),
                preferred_element_type=f32) + params["bq"], 0.0)[:, None, :]
    joint = v_proj * q_proj
    logits = jnp.dot(joint, params["wl"].astype(f32)) + params["bl"]  # [B,K,G]
    logits = logits * v_mask[..., None]
    p = jax.nn.softmax(logits, axis=1)
    return p, logits


def _run_case(seed, B, K, v_dim, q_dim, hid_dim, glimpses):
    key = jax.random.PRNGKey(seed)
    k_v, k_m, k_q, k_p = jax.random.split(key, 4)

    v = jax.random.normal(k_v, (B, K, v_dim), jnp.float32)
    v_mask = (jax.random.uniform(k_m, (B, K)) > 0.3).astype(jnp.float32)
    q = jax.random.normal(k_q, (B, q_dim), jnp.float32)
    params = init_params(k_p, v_dim, q_dim, hid_dim, glimpses)

    p_out, logits_out = attention_forward(v, v_mask, q, params)
    jax.block_until_ready((p_out, logits_out))

    p_ref, logits_ref = reference_forward(v, v_mask, q, params)
    assert p_out.shape == (B, K, glimpses)
    assert logits_out.shape == (B, K, glimpses)
    # pl.reciprocal(approx=True) -> softmax rows deviate ~1e-3/1e-4 from exact.
    assert jnp.allclose(p_out, p_ref, atol=2e-3, rtol=2e-3)
    assert jnp.allclose(logits_out, logits_ref, atol=2e-3, rtol=2e-3)


if __name__ == "__main__":
    # Small shapes consistent with the module: v:[B,K,v_dim], v_mask:[B,K], q:[B,q_dim]
    # Case 1 exercises the padded-v path (v_dim not lane-aligned).
    _run_case(0, B=2, K=16, v_dim=24, q_dim=20, hid_dim=32, glimpses=1)
    # Case 2 exercises the direct-v (no pad, in-kernel bf16 cast) path and G>1.
    _run_case(0, B=2, K=8, v_dim=128, q_dim=16, hid_dim=64, glimpses=2)
    # NOTE: nn.Dropout is treated as identity (eval mode); no in-kernel dropout.
    print("KERNEL_OK")
</pallas_src>

<mosaic_0001>
module attributes {stable_mosaic.version = 11 : i64} {
  func.func @_attention_kernel(%arg0: i32, %arg1: memref<16x128xbf16, #tpu.memory_space<vmem>>, %arg2: memref<1x1x128xbf16, #tpu.memory_space<vmem>>, %arg3: memref<1x1x16xf32, #tpu.memory_space<vmem>>, %arg4: memref<128x128xbf16, #tpu.memory_space<vmem>>, %arg5: memref<1x128xf32, #tpu.memory_space<vmem>>, %arg6: memref<128x128xbf16, #tpu.memory_space<vmem>>, %arg7: memref<1x128xf32, #tpu.memory_space<vmem>>, %arg8: memref<1x128xf32, #tpu.memory_space<vmem>>, %arg9: memref<1x1x1xf32, #tpu.memory_space<vmem>>, %arg10: memref<1x1x16xf32, #tpu.memory_space<vmem>>, %arg11: memref<1x1x16xf32, #tpu.memory_space<vmem>>) attributes {dimension_semantics = [#tpu.dimension_semantics<parallel>], iteration_bounds = array<i64: 2>, scalar_prefetch = 0 : i64, scratch_operands = 0 : i64, tpu.core_type = #tpu.core_type<tc>, window_params = [{transform_indices = @transform_0, window_bounds = array<i64: 16, 128>}, {transform_indices = @transform_1, window_bounds = array<i64: 1, 1, 128>}, {transform_indices = @transform_2, window_bounds = array<i64: 1, 1, 16>}, {pipeline_mode = #tpu.pipeline_mode<synchronous>, transform_indices = @transform_3, window_bounds = array<i64: 128, 128>}, {pipeline_mode = #tpu.pipeline_mode<synchronous>, transform_indices = @transform_4, window_bounds = array<i64: 1, 128>}, {pipeline_mode = #tpu.pipeline_mode<synchronous>, transform_indices = @transform_5, window_bounds = array<i64: 128, 128>}, {pipeline_mode = #tpu.pipeline_mode<synchronous>, transform_indices = @transform_6, window_bounds = array<i64: 1, 128>}, {pipeline_mode = #tpu.pipeline_mode<synchronous>, transform_indices = @transform_7, window_bounds = array<i64: 1, 128>}, {pipeline_mode = #tpu.pipeline_mode<synchronous>, transform_indices = @transform_8, window_bounds = array<i64: 1, 1, 1>}, {transform_indices = @transform_9, window_bounds = array<i64: 1, 1, 16>}, {transform_indices = @transform_10, window_bounds = array<i64: 1, 1, 16>}]} {
    %c0 = arith.constant 0 : index
    %c0_0 = arith.constant 0 : index
    %0 = vector.load %arg1[%c0, %c0_0] : memref<16x128xbf16, #tpu.memory_space<vmem>>, vector<16x128xbf16>
    %c0_1 = arith.constant 0 : index
    %c0_2 = arith.constant 0 : index
    %1 = vector.load %arg4[%c0_1, %c0_2] : memref<128x128xbf16, #tpu.memory_space<vmem>>, vector<128x128xbf16>
    %cst = arith.constant dense<0.000000e+00> : vector<16x128xf32>
    %2 = tpu.matmul %0, %1, %cst {dimension_numbers = #tpu.dot_dimension_numbers<[1], [0], [0], [1], [0, 0, 1, 1], [], []>} : vector<16x128xbf16>, vector<128x128xbf16>, vector<16x128xf32> -> vector<16x128xf32>
    %c0_3 = arith.constant 0 : index
    %c0_4 = arith.constant 0 : index
    %3 = vector.load %arg5[%c0_3, %c0_4] : memref<1x128xf32, #tpu.memory_space<vmem>>, vector<1x128xf32>
    %4 = vector.broadcast %3 : vector<1x128xf32> to vector<16x128xf32>
    %5 = arith.addf %2, %4 : vector<16x128xf32>
    %cst_5 = arith.constant 0.000000e+00 : f32
    %6 = vector.broadcast %cst_5 : f32 to vector<16x128xf32>
    %7 = arith.maximumf %5, %6 : vector<16x128xf32>
    %c0_6 = arith.constant 0 : index
    %c0_7 = arith.constant 0 : index
    %c0_8 = arith.constant 0 : index
    %8 = vector.load %arg2[%c0_6, %c0_7, %c0_8] : memref<1x1x128xbf16, #tpu.memory_space<vmem>>, vector<1x1x128xbf16>
    %9 = vector.shape_cast %8 : vector<1x1x128xbf16> to vector<1x128xbf16>
    %c0_9 = arith.constant 0 : index
    %c0_10 = arith.constant 0 : index
    %10 = vector.load %arg6[%c0_9, %c0_10] : memref<128x128xbf16, #tpu.memory_space<vmem>>, vector<128x128xbf16>
    %cst_11 = arith.constant dense<0.000000e+00> : vector<1x128xf32>
    %11 = tpu.matmul %9, %10, %cst_11 {dimension_numbers = #tpu.dot_dimension_numbers<[1], [0], [0], [1], [0, 0, 1, 1], [], []>} : vector<1x128xbf16>, vector<128x128xbf16>, vector<1x128xf32> -> vector<1x128xf32>
    %c0_12 = arith.constant 0 : index
    %c0_13 = arith.constant 0 : index
    %12 = vector.load %arg7[%c0_12, %c0_13] : memref<1x128xf32, #tpu.memory_space<vmem>>, vector<1x128xf32>
    %13 = arith.addf %11, %12 : vector<1x128xf32>
    %cst_14 = arith.constant 0.000000e+00 : f32
    %14 = vector.broadcast %cst_14 : f32 to vector<1x128xf32>
    %15 = arith.maximumf %13, %14 : vector<1x128xf32>
    %16 = vector.shape_cast %15 : vector<1x128xf32> to vector<1x1x128xf32>
    %c0_15 = arith.constant 0 : index
    %c0_16 = arith.constant 0 : index
    %17 = vector.load %arg8[%c0_15, %c0_16] : memref<1x128xf32, #tpu.memory_space<vmem>>, vector<1x128xf32>
    %18 = vector.shape_cast %17 : vector<1x128xf32> to vector<1x1x128xf32>
    %19 = arith.mulf %16, %18 : vector<1x1x128xf32>
    %20 = vector.shape_cast %7 : vector<16x128xf32> to vector<1x16x128xf32>
    "tpu.trace_start"() <{level = 10 : i32, message = "bgh,bkh->bgk"}> : () -> ()
    %cst_17 = arith.constant dense<0.000000e+00> : vector<1x1x16xf32>
    %21 = tpu.matmul %19, %20, %cst_17 {dimension_numbers = #tpu.dot_dimension_numbers<[2], [2], [1], [1], [0, 0, 0, 1, 1, 1], [0], [0]>} : vector<1x1x128xf32>, vector<1x16x128xf32>, vector<1x1x16xf32> -> vector<1x1x16xf32>
    "tpu.trace_stop"() : () -> ()
    %c0_18 = arith.constant 0 : index
    %c0_19 = arith.constant 0 : index
    %c0_20 = arith.constant 0 : index
    %22 = vector.load %arg9[%c0_18, %c0_19, %c0_20] : memref<1x1x1xf32, #tpu.memory_space<vmem>>, vector<1x1x1xf32>
    %23 = vector.broadcast %22 : vector<1x1x1xf32> to vector<1x1x16xf32>
    %24 = arith.addf %21, %23 : vector<1x1x16xf32>
    %c0_21 = arith.constant 0 : index
    %c0_22 = arith.constant 0 : index
    %c0_23 = arith.constant 0 : index
    %25 = vector.load %arg3[%c0_21, %c0_22, %c0_23] : memref<1x1x16xf32, #tpu.memory_space<vmem>>, vector<1x1x16xf32>
    %26 = arith.mulf %24, %25 : vector<1x1x16xf32>
    %27 = tpu.iota {dimensions = array<i32: 2>} : vector<1x1x16xi32>
    %c16_i32 = arith.constant 16 : i32
    %28 = vector.broadcast %c16_i32 : i32 to vector<1x1x16xi32>
    %29 = arith.cmpi slt, %27, %28 : vector<1x1x16xi32>
    %cst_24 = arith.constant -1.000000e+30 : f32
    %30 = vector.broadcast %cst_24 : f32 to vector<1x1x16xf32>
    %31 = arith.select %29, %26, %30 : vector<1x1x16xi1>, vector<1x1x16xf32>
    %cst_25 = arith.constant dense<0xFF800000> : vector<1x1xf32>
    %32 = vector.multi_reduction <maximumf>, %31, %cst_25 [2] : vector<1x1x16xf32> to vector<1x1xf32>
    %33 = vector.shape_cast %32 : vector<1x1xf32> to vector<1x1x1xf32>
    %34 = vector.broadcast %33 : vector<1x1x1xf32> to vector<1x1x16xf32>
    %35 = arith.subf %31, %34 : vector<1x1x16xf32>
    %36 = math.exp %35 : vector<1x1x16xf32>
    %cst_26 = arith.constant dense<0.000000e+00> : vector<1x1xf32>
    %37 = vector.multi_reduction <add>, %36, %cst_26 [2] : vector<1x1x16xf32> to vector<1x1xf32>
    %38 = vector.shape_cast %37 : vector<1x1xf32> to vector<1x1x1xf32>
    %39 = tpu.reciprocal %38 {approx = true} : vector<1x1x1xf32> -> vector<1x1x1xf32>
    %40 = vector.broadcast %39 : vector<1x1x1xf32> to vector<1x1x16xf32>
    %41 = arith.mulf %36, %40 : vector<1x1x16xf32>
    %c0_27 = arith.constant 0 : index
    %c0_28 = arith.constant 0 : index
    %c0_29 = arith.constant 0 : index
    %42 = vector.load %arg10[%c0_27, %c0_28, %c0_29] : memref<1x1x16xf32, #tpu.memory_space<vmem>>, vector<1x1x16xf32>
    tpu.vector_store %arg10[%c0_27, %c0_28, %c0_29], %41 {strides = array<i32>} : memref<1x1x16xf32, #tpu.memory_space<vmem>>, vector<1x1x16xf32>,
    %c0_30 = arith.constant 0 : index
    %c0_31 = arith.constant 0 : index
    %c0_32 = arith.constant 0 : index
    %43 = vector.load %arg11[%c0_30, %c0_31, %c0_32] : memref<1x1x16xf32, #tpu.memory_space<vmem>>, vector<1x1x16xf32>
    tpu.vector_store %arg11[%c0_30, %c0_31, %c0_32], %26 {strides = array<i32>} : memref<1x1x16xf32, #tpu.memory_space<vmem>>, vector<1x1x16xf32>,
    return
  }
  func.func @transform_0(%arg0: i32) -> (i32, i32) {
    %c0_i32 = arith.constant 0 : i32
    %c0_i32_0 = arith.constant 0 : i32
    return %arg0, %c0_i32 : i32, i32
  }
  func.func @transform_1(%arg0: i32) -> (i32, i32, i32) {
    %c0_i32 = arith.constant 0 : i32
    %c0_i32_0 = arith.constant 0 : i32
    %c0_i32_1 = arith.constant 0 : i32
    return %arg0, %c0_i32, %c0_i32_0 : i32, i32, i32
  }
  func.func @transform_2(%arg0: i32) -> (i32, i32, i32) {
    %c0_i32 = arith.constant 0 : i32
    %c0_i32_0 = arith.constant 0 : i32
    %c0_i32_1 = arith.constant 0 : i32
    return %arg0, %c0_i32, %c0_i32_0 : i32, i32, i32
  }
  func.func @transform_3(%arg0: i32) -> (i32, i32) {
    %c0_i32 = arith.constant 0 : i32
    %c0_i32_0 = arith.constant 0 : i32
    %c0_i32_1 = arith.constant 0 : i32
    return %c0_i32, %c0_i32_0 : i32, i32
  }
  func.func @transform_4(%arg0: i32) -> (i32, i32) {
    %c0_i32 = arith.constant 0 : i32
    %c0_i32_0 = arith.constant 0 : i32
    %c0_i32_1 = arith.constant 0 : i32
    return %c0_i32, %c0_i32_0 : i32, i32
  }
  func.func @transform_5(%arg0: i32) -> (i32, i32) {
    %c0_i32 = arith.constant 0 : i32
    %c0_i32_0 = arith.constant 0 : i32
    %c0_i32_1 = arith.constant 0 : i32
    return %c0_i32, %c0_i32_0 : i32, i32
  }
  func.func @transform_6(%arg0: i32) -> (i32, i32) {
    %c0_i32 = arith.constant 0 : i32
    %c0_i32_0 = arith.constant 0 : i32
    %c0_i32_1 = arith.constant 0 : i32
    return %c0_i32, %c0_i32_0 : i32, i32
  }
  func.func @transform_7(%arg0: i32) -> (i32, i32) {
    %c0_i32 = arith.constant 0 : i32
    %c0_i32_0 = arith.constant 0 : i32
    %c0_i32_1 = arith.constant 0 : i32
    return %c0_i32, %c0_i32_0 : i32, i32
  }
  func.func @transform_8(%arg0: i32) -> (i32, i32, i32) {
    %c0_i32 = arith.constant 0 : i32
    %c0_i32_0 = arith.constant 0 : i32
    %c0_i32_1 = arith.constant 0 : i32
    %c0_i32_2 = arith.constant 0 : i32
    return %c0_i32, %c0_i32_0, %c0_i32_1 : i32, i32, i32
  }
  func.func @transform_9(%arg0: i32) -> (i32, i32, i32) {
    %c0_i32 = arith.constant 0 : i32
    %c0_i32_0 = arith.constant 0 : i32
    %c0_i32_1 = arith.constant 0 : i32
    return %arg0, %c0_i32, %c0_i32_0 : i32, i32, i32
  }
  func.func @transform_10(%arg0: i32) -> (i32, i32, i32) {
    %c0_i32 = arith.constant 0 : i32
    %c0_i32_0 = arith.constant 0 : i32
    %c0_i32_1 = arith.constant 0 : i32
    return %arg0, %c0_i32, %c0_i32_0 : i32, i32, i32
  }
}

</mosaic_0001>

<llo_original>
// kernel: attention_forward.1
$region0: #{attention_forward.1}
  #allocation0 [shape = 'u32[]', space=smem, size = 0x4, offset = 0x4, fixed_abs, tag = 'smem constant byte address 0x4 - core index']
  #allocation1 [shape = 'u32[144,128]{1,0:T(1,128)}', space=vmem, size = 0x12000, scoped, tag = 'internal scratch']
  #allocation2 [shape = 'f32[1,1,1]{2,1,0:T(1,128)S(1)}', space=vmem, size = 0x200, scoped, tag = 'scoped memory for attention_forward.1']
  %s0 = inlined_call_operand.vmem [shape: bf16[32,128], index: 0, kind: input, shape index: {}]
  %s1 = inlined_call_operand.vmem [shape: bf16[2,1,128], index: 1, kind: input, shape index: {}]
  %s2 = inlined_call_operand.vmem [shape: f32[2,1,16], index: 2, kind: input, shape index: {}]
  %s3 = inlined_call_operand.vmem [shape: bf16[128,128], index: 3, kind: input, shape index: {}]
  %s4 = inlined_call_operand.vmem [shape: f32[1,128], index: 4, kind: input, shape index: {}]
  %s5 = inlined_call_operand.vmem [shape: bf16[128,128], index: 5, kind: input, shape index: {}]
  %s6 = inlined_call_operand.vmem [shape: f32[1,128], index: 6, kind: input, shape index: {}]
  %s7 = inlined_call_operand.vmem [shape: f32[1,128], index: 7, kind: input, shape index: {}]
  %s8 = inlined_call_operand.<no memory space> [shape: f32[1,1,1], index: 8, kind: input, shape index: {}]
  %s9 = inlined_call_operand.hbm [shape: f32[2,1,16], index: 9, kind: output, shape index: {0}]
  %s10 = inlined_call_operand.hbm [shape: f32[2,1,16], index: 10, kind: output, shape index: {1}]
  %11 = xla_tuple %s9, %s10
  %s12 = sld [smem:[#allocation0]]
  $region77: #{attention_forward.1} parent=0
    _
  %s14 = ssub.s32 1, %s12
  %s15 = scalar_select 0, %s14, %s12
  %v16 = vstv %s8
  %17 = vst [vmem:[#allocation2] sm:$0x1] %v16
  $region1: #{attention_forward.1} parent=0
    #allocation3 [shape = 'u8[1024]{0}', space=vmem, size = 0x400, scoped, tag = 'output window, operand 0']
    #allocation4 [shape = 's32[2]{0}', space=sflag, size = 0x8, scoped, tag = 'scoped memory for attention_forward.1']
    #allocation5 [shape = 'u8[1024]{0}', space=vmem, size = 0x400, scoped, tag = 'output window, operand 1']
    #allocation6 [shape = 's32[2]{0}', space=sflag, size = 0x8, scoped, tag = 'scoped memory for attention_forward.1']
    %18 = vsyncpa [#allocation4], 0
    %s19 = scalar_lea.sflag [#allocation4], 1
    %20 = vsyncpa %s19, 0
    %21 = vsyncpa [#allocation6], 0
    %s22 = scalar_lea.sflag [#allocation6], 1
    %23 = vsyncpa %s22, 0
    loop: start=0, step=1, limit=4
    $region2: #{attention_forward.1} parent=1 // loop_pre_header
      _
    $region3: #{attention_forward.1} parent=1 // loop_header
      %s25 = sphi 0, %s29
      %p26 = scmp.ge.s32.totalorder %s25, 4
      %s35 = sphi 0, %s37
      %s38 = sphi 0, %s35
      %s39 = sphi 0, %s38
      %s55 = sphi 0, %s39
      %s61 = sphi 0, %s63
      %s64 = sphi 0, %s61
      %s65 = sphi 0, %s64
      %s81 = sphi 0, %s65
      %s87 = sphi 0, %s89
      %s90 = sphi 0, %s87
      %s91 = sphi 0, %s90
      %s107 = sphi 0, %s91
      %s111 = sphi 0, %s111
      %s113 = sphi 0, %s111
      %s114 = sphi 0, %s113
      %s128 = sphi 0, %s114
      %s132 = sphi 0, %s132
      %s134 = sphi 0, %s132
      %s135 = sphi 0, %s134
      %s149 = sphi 0, %s135
      %s153 = sphi 0, %s153
      %s155 = sphi 0, %s153
      %s156 = sphi 0, %s155
      %s170 = sphi 0, %s156
      %s174 = sphi 0, %s174
      %s176 = sphi 0, %s174
      %s177 = sphi 0, %s176
      %s191 = sphi 0, %s177
      %s195 = sphi 0, %s195
      %s197 = sphi 0, %s195
      %s198 = sphi 0, %s197
      %s212 = sphi 0, %s198
      %s216 = sphi 0, %s216
      %s218 = sphi 0, %s216
      %s219 = sphi 0, %s218
      %s233 = sphi 0, %s219
      %s239 = sphi 0, %s241
      %s242 = sphi 0, %s239
      %s243 = sphi 0, %s242
      %s259 = sphi 0, %s243
      %s265 = sphi 0, %s267
      %s268 = sphi 0, %s265
      %s269 = sphi 0, %s268
      %s285 = sphi 0, %s269
    $region4: #{attention_forward.1} parent=1 // loop_header_branch
      %28 = sbr.rel (%p26) target = $region8
    $region5: #{attention_forward.1} parent=1 // loop_body
      %s30 = ssub.s32 %s25, 1
      %s31 = ssub.s32 %s25, 2
      %s32 = sadd.s32 %s25, 1
      %s33 = ssub.s32 %s25, %s32
      %p34 = scmp.eq.s32.totalorder %s33, 0
      %s36 = sadd.s32 %s35, 1
      %s37 = scalar_select %p34, %s35, %s36
      %p40 = pneg %p34
      %p41 = scmp.eq.s32.totalorder %s25, 1
      %p42 = por %p40, %p41
      %p43 = scmp.ne.s32.totalorder %s35, %s38
      %p44 = scmp.eq.s32.totalorder %s25, 0
      %p45 = por %p43, %p44
      %p46 = scmp.ne.s32.totalorder %s35, %s38
      %p47 = scmp.eq.s32.totalorder %s30, 1
      %p48 = por %p46, %p47
      %p49 = scmp.ne.s32.totalorder %s38, %s39
      %p50 = scmp.eq.s32.totalorder %s30, 0
      %p51 = por %p49, %p50
      %p52 = scmp.ne.s32.totalorder %s38, %s39
      %p53 = scmp.eq.s32.totalorder %s31, 1
      %p54 = por %p52, %p53
      %p56 = scmp.ne.s32.totalorder %s39, %s55
      %p57 = scmp.eq.s32.totalorder %s31, 0
      %p58 = por %p56, %p57
      %s59 = ssub.s32 %s25, %s32
      %p60 = scmp.eq.s32.totalorder %s59, 0
      %s62 = sadd.s32 %s61, 1
      %s63 = scalar_select %p60, %s61, %s62
      %p66 = pneg %p60
      %p67 = scmp.eq.s32.totalorder %s25, 1
      %p68 = por %p66, %p67
      %p69 = scmp.ne.s32.totalorder %s61, %s64
      %p70 = scmp.eq.s32.totalorder %s25, 0
      %p71 = por %p69, %p70
      %p72 = scmp.ne.s32.totalorder %s61, %s64
      %p73 = scmp.eq.s32.totalorder %s30, 1
      %p74 = por %p72, %p73
      %p75 = scmp.ne.s32.totalorder %s64, %s65
      %p76 = scmp.eq.s32.totalorder %s30, 0
      %p77 = por %p75, %p76
      %p78 = scmp.ne.s32.totalorder %s64, %s65
      %p79 = scmp.eq.s32.totalorder %s31, 1
      %p80 = por %p78, %p79
      %p82 = scmp.ne.s32.totalorder %s65, %s81
      %p83 = scmp.eq.s32.totalorder %s31, 0
      %p84 = por %p82, %p83
      %s85 = ssub.s32 %s25, %s32
      %p86 = scmp.eq.s32.totalorder %s85, 0
      %s88 = sadd.s32 %s87, 1
      %s89 = scalar_select %p86, %s87, %s88
      %p92 = pneg %p86
      %p93 = scmp.eq.s32.totalorder %s25, 1
      %p94 = por %p92, %p93
      %p95 = scmp.ne.s32.totalorder %s87, %s90
      %p96 = scmp.eq.s32.totalorder %s25, 0
      %p97 = por %p95, %p96
      %p98 = scmp.ne.s32.totalorder %s87, %s90
      %p99 = scmp.eq.s32.totalorder %s30, 1
      %p100 = por %p98, %p99
      %p101 = scmp.ne.s32.totalorder %s90, %s91
      %p102 = scmp.eq.s32.totalorder %s30, 0
      %p103 = por %p101, %p102
      %p104 = scmp.ne.s32.totalorder %s90, %s91
      %p105 = scmp.eq.s32.totalorder %s31, 1
      %p106 = por %p104, %p105
      %p108 = scmp.ne.s32.totalorder %s91, %s107
      %p109 = scmp.eq.s32.totalorder %s31, 0
      %p110 = por %p108, %p109
      %s112 = sadd.s32 %s111, 1
      %p115 = scmp.eq.s32.totalorder %s25, 1
      %p116 = scmp.ne.s32.totalorder %s111, %s113
      %p117 = scmp.eq.s32.totalorder %s25, 0
      %p118 = por %p116, %p117
      %p119 = scmp.ne.s32.totalorder %s111, %s113
      %p120 = scmp.eq.s32.totalorder %s30, 1
      %p121 = por %p119, %p120
      %p122 = scmp.ne.s32.totalorder %s113, %s114
      %p123 = scmp.eq.s32.totalorder %s30, 0
      %p124 = por %p122, %p123
      %p125 = scmp.ne.s32.totalorder %s113, %s114
      %p126 = scmp.eq.s32.totalorder %s31, 1
      %p127 = por %p125, %p126
      %p129 = scmp.ne.s32.totalorder %s114, %s128
      %p130 = scmp.eq.s32.totalorder %s31, 0
      %p131 = por %p129, %p130
      %s133 = sadd.s32 %s132, 1
      %p136 = scmp.eq.s32.totalorder %s25, 1
      %p137 = scmp.ne.s32.totalorder %s132, %s134
      %p138 = scmp.eq.s32.totalorder %s25, 0
      %p139 = por %p137, %p138
      %p140 = scmp.ne.s32.totalorder %s132, %s134
      %p141 = scmp.eq.s32.totalorder %s30, 1
      %p142 = por %p140, %p141
      %p143 = scmp.ne.s32.totalorder %s134, %s135
      %p144 = scmp.eq.s32.totalorder %s30, 0
      %p145 = por %p143, %p144
      %p146 = scmp.ne.s32.totalorder %s134, %s135
      %p147 = scmp.eq.s32.totalorder %s31, 1
      %p148 = por %p146, %p147
      %p150 = scmp.ne.s32.totalorder %s135, %s149
      %p151 = scmp.eq.s32.totalorder %s31, 0
      %p152 = por %p150, %p151
      %s154 = sadd.s32 %s153, 1
      %p157 = scmp.eq.s32.totalorder %s25, 1
      %p158 = scmp.ne.s32.totalorder %s153, %s155
      %p159 = scmp.eq.s32.totalorder %s25, 0
      %p160 = por %p158, %p159
      %p161 = scmp.ne.s32.totalorder %s153, %s155
      %p162 = scmp.eq.s32.totalorder %s30, 1
      %p163 = por %p161, %p162
      %p164 = scmp.ne.s32.totalorder %s155, %s156
      %p165 = scmp.eq.s32.totalorder %s30, 0
      %p166 = por %p164, %p165
      %p167 = scmp.ne.s32.totalorder %s155, %s156
      %p168 = scmp.eq.s32.totalorder %s31, 1
      %p169 = por %p167, %p168
      %p171 = scmp.ne.s32.totalorder %s156, %s170
      %p172 = scmp.eq.s32.totalorder %s31, 0
      %p173 = por %p171, %p172
      %s175 = sadd.s32 %s174, 1
      %p178 = scmp.eq.s32.totalorder %s25, 1
      %p179 = scmp.ne.s32.totalorder %s174, %s176
      %p180 = scmp.eq.s32.totalorder %s25, 0
      %p181 = por %p179, %p180
      %p182 = scmp.ne.s32.totalorder %s174, %s176
      %p183 = scmp.eq.s32.totalorder %s30, 1
      %p184 = por %p182, %p183
      %p185 = scmp.ne.s32.totalorder %s176, %s177
      %p186 = scmp.eq.s32.totalorder %s30, 0
      %p187 = por %p185, %p186
      %p188 = scmp.ne.s32.totalorder %s176, %s177
      %p189 = scmp.eq.s32.totalorder %s31, 1
      %p190 = por %p188, %p189
      %p192 = scmp.ne.s32.totalorder %s177, %s191
      %p193 = scmp.eq.s32.totalorder %s31, 0
      %p194 = por %p192, %p193
      %s196 = sadd.s32 %s195, 1
      %p199 = scmp.eq.s32.totalorder %s25, 1
      %p200 = scmp.ne.s32.totalorder %s195, %s197
      %p201 = scmp.eq.s32.totalorder %s25, 0
      %p202 = por %p200, %p201
      %p203 = scmp.ne.s32.totalorder %s195, %s197
      %p204 = scmp.eq.s32.totalorder %s30, 1
      %p205 = por %p203, %p204
      %p206 = scmp.ne.s32.totalorder %s197, %s198
      %p207 = scmp.eq.s32.totalorder %s30, 0
      %p208 = por %p206, %p207
      %p209 = scmp.ne.s32.totalorder %s197, %s198
      %p210 = scmp.eq.s32.totalorder %s31, 1
      %p211 = por %p209, %p210
      %p213 = scmp.ne.s32.totalorder %s198, %s212
      %p214 = scmp.eq.s32.totalorder %s31, 0
      %p215 = por %p213, %p214
      %s217 = sadd.s32 %s216, 1
      %p220 = scmp.eq.s32.totalorder %s25, 1
      %p221 = scmp.ne.s32.totalorder %s216, %s218
      %p222 = scmp.eq.s32.totalorder %s25, 0
      %p223 = por %p221, %p222
      %p224 = scmp.ne.s32.totalorder %s216, %s218
      %p225 = scmp.eq.s32.totalorder %s30, 1
      %p226 = por %p224, %p225
      %p227 = scmp.ne.s32.totalorder %s218, %s219
      %p228 = scmp.eq.s32.totalorder %s30, 0
      %p229 = por %p227, %p228
      %p230 = scmp.ne.s32.totalorder %s218, %s219
      %p231 = scmp.eq.s32.totalorder %s31, 1
      %p232 = por %p230, %p231
      %p234 = scmp.ne.s32.totalorder %s219, %s233
      %p235 = scmp.eq.s32.totalorder %s31, 0
      %p236 = por %p234, %p235
      %s237 = ssub.s32 %s25, %s32
      %p238 = scmp.eq.s32.totalorder %s237, 0
      %s240 = sadd.s32 %s239, 1
      %s241 = scalar_select %p238, %s239, %s240
      %p244 = pneg %p238
      %p245 = scmp.eq.s32.totalorder %s25, 1
      %p246 = por %p244, %p245
      %p247 = scmp.ne.s32.totalorder %s239, %s242
      %p248 = scmp.eq.s32.totalorder %s25, 0
      %p249 = por %p247, %p248
      %p250 = scmp.ne.s32.totalorder %s239, %s242
      %p251 = scmp.eq.s32.totalorder %s30, 1
      %p252 = por %p250, %p251
      %p253 = scmp.ne.s32.totalorder %s242, %s243
      %p254 = scmp.eq.s32.totalorder %s30, 0
      %p255 = por %p253, %p254
      %p256 = scmp.ne.s32.totalorder %s242, %s243
      %p257 = scmp.eq.s32.totalorder %s31, 1
      %p258 = por %p256, %p257
      %p260 = scmp.ne.s32.totalorder %s243, %s259
      %p261 = scmp.eq.s32.totalorder %s31, 0
      %p262 = por %p260, %p261
      %s263 = ssub.s32 %s25, %s32
      %p264 = scmp.eq.s32.totalorder %s263, 0
      %s266 = sadd.s32 %s265, 1
      %s267 = scalar_select %p264, %s265, %s266
      %p270 = pneg %p264
      %p271 = scmp.eq.s32.totalorder %s25, 1
      %p272 = por %p270, %p271
      %p273 = scmp.ne.s32.totalorder %s265, %s268
      %p274 = scmp.eq.s32.totalorder %s25, 0
      %p275 = por %p273, %p274
      %p276 = scmp.ne.s32.totalorder %s265, %s268
      %p277 = scmp.eq.s32.totalorder %s30, 1
      %p278 = por %p276, %p277
      %p279 = scmp.ne.s32.totalorder %s268, %s269
      %p280 = scmp.eq.s32.totalorder %s30, 0
      %p281 = por %p279, %p280
      %p282 = scmp.ne.s32.totalorder %s268, %s269
      %p283 = scmp.eq.s32.totalorder %s31, 1
      %p284 = por %p282, %p283
      %p286 = scmp.ne.s32.totalorder %s269, %s285
      %p287 = scmp.eq.s32.totalorder %s31, 0
      %p288 = por %p286, %p287
      %p289 = scmp.le.s32.totalorder 1, %s25
      %p290 = scmp.lt.s32.totalorder %s25, 3
      %p291 = pnand %p289, %p290
      %p292 = pneg %p291
      // Predicated region
      $region9: #{attention_forward.1} parent=5 // pred_check
        _
      $region10: #{attention_forward.1} parent=5 // pred_check_branch
        %294 = sbr.rel (%p291) target = $region12
      $region11: #{attention_forward.1} parent=5 // pred_region
        %s295 = ssub.s32 %s25, 1
        // Predicated region
        $region13: #{attention_forward.1} parent=11 // pred_check
          %p296 = pneg %p124
        $region14: #{attention_forward.1} parent=11 // pred_check_branch
          %298 = sbr.rel (%p296) target = $region16
        $region15: #{attention_forward.1} parent=11 // pred_region
          _
        $region16: #{attention_forward.1} parent=11 // pred_fallthru
          _
        // Predicated region
        $region17: #{attention_forward.1} parent=11 // pred_check
          %p299 = pneg %p145
        $region18: #{attention_forward.1} parent=11 // pred_check_branch
          %301 = sbr.rel (%p299) target = $region20
        $region19: #{attention_forward.1} parent=11 // pred_region
          _
        $region20: #{attention_forward.1} parent=11 // pred_fallthru
          _
        // Predicated region
        $region21: #{attention_forward.1} parent=11 // pred_check
          %p302 = pneg %p166
        $region22: #{attention_forward.1} parent=11 // pred_check_branch
          %304 = sbr.rel (%p302) target = $region24
        $region23: #{attention_forward.1} parent=11 // pred_region
          _
        $region24: #{attention_forward.1} parent=11 // pred_fallthru
          _
        // Predicated region
        $region25: #{attention_forward.1} parent=11 // pred_check
          %p305 = pneg %p187
        $region26: #{attention_forward.1} parent=11 // pred_check_branch
          %307 = sbr.rel (%p305) target = $region28
        $region27: #{attention_forward.1} parent=11 // pred_region
          _
        $region28: #{attention_forward.1} parent=11 // pred_fallthru
          _
        // Predicated region
        $region29: #{attention_forward.1} parent=11 // pred_check
          %p308 = pneg %p208
        $region30: #{attention_forward.1} parent=11 // pred_check_branch
          %310 = sbr.rel (%p308) target = $region32
        $region31: #{attention_forward.1} parent=11 // pred_region
          _
        $region32: #{attention_forward.1} parent=11 // pred_fallthru
          _
        // Predicated region
        $region33: #{attention_forward.1} parent=11 // pred_check
          %p311 = pneg %p229
        $region34: #{attention_forward.1} parent=11 // pred_check_branch
          %313 = sbr.rel (%p311) target = $region36
        $region35: #{attention_forward.1} parent=11 // pred_region
          _
        $region36: #{attention_forward.1} parent=11 // pred_fallthru
          _
      $region12: #{attention_forward.1} parent=5 // pred_fallthru
        _
      %p314 = scmp.lt.s32.totalorder %s25, 2
      // Predicated region
      $region37: #{attention_forward.1} parent=5 // pred_check
        %p315 = pneg %p314
      $region38: #{attention_forward.1} parent=5 // pred_check_branch
        %317 = sbr.rel (%p315) target = $region40
      $region39: #{attention_forward.1} parent=5 // pred_region
        // Predicated region
        $region41: #{attention_forward.1} parent=39 // pred_check
          %p318 = pneg %p45
        $region42: #{attention_forward.1} parent=39 // pred_check_branch
          %320 = sbr.rel (%p318) target = $region44
        $region43: #{attention_forward.1} parent=39 // pred_region
          %s321 = smul.u32 2, %s25
          %p322 = scmp.lt.s32.totalorder %s321, 3
          %s323 = scalar_select %p322, %s321, 3
          %s324 = smul.addr %s323, 4
          %s325 = scalar_lea.vmem %s0, %s324
          %s326 = smul.u32 2, %s25
        $region44: #{attention_forward.1} parent=39 // pred_fallthru
          _
        // Predicated region
        $region45: #{attention_forward.1} parent=39 // pred_check
          %p327 = pneg %p71
        $region46: #{attention_forward.1} parent=39 // pred_check_branch
          %329 = sbr.rel (%p327) target = $region48
        $region47: #{attention_forward.1} parent=39 // pred_region
          %p330 = scmp.lt.s32.totalorder %s25, 1
          %s331 = scalar_select %p330, %s25, 1
          %s332 = scalar_lea.vmem %s1, %s331
        $region48: #{attention_forward.1} parent=39 // pred_fallthru
          _
        // Predicated region
        $region49: #{attention_forward.1} parent=39 // pred_check
          %p333 = pneg %p97
        $region50: #{attention_forward.1} parent=39 // pred_check_branch
          %335 = sbr.rel (%p333) target = $region52
        $region51: #{attention_forward.1} parent=39 // pred_region
          %p336 = scmp.lt.s32.totalorder %s25, 1
          %s337 = scalar_select %p336, %s25, 1
          %s338 = scalar_lea.vmem %s2, %s337
        $region52: #{attention_forward.1} parent=39 // pred_fallthru
          _
      $region40: #{attention_forward.1} parent=5 // pred_fallthru
        _
      %p339 = scmp.le.s32.totalorder 1, %s25
      %p340 = scmp.lt.s32.totalorder %s25, 3
      %p341 = pnand %p339, %p340
      %p342 = pneg %p341
      // Predicated region
      $region53: #{attention_forward.1} parent=5 // pred_check
        _
      $region54: #{attention_forward.1} parent=5 // pred_check_branch
        %344 = sbr.rel (%p341) target = $region56
      $region55: #{attention_forward.1} parent=5 // pred_region
        %s345 = ssub.s32 %s25, 1
        %s346 = smul.u32 2, %s30
        %p347 = scmp.lt.s32.totalorder %s346, 3
        %s348 = scalar_select %p347, %s346, 3
        %s349 = smul.addr %s348, 4
        %s350 = scalar_lea.vmem %s0, %s349
        %p351 = pneg %p51
        %p352 = pneg %p48
        %p353 = scmp.lt.s32.totalorder %s30, 1
        %s354 = scalar_select %p353, %s30, 1
        %s355 = scalar_lea.vmem %s1, %s354
        %p356 = pneg %p77
        %p357 = pneg %p74
        %p358 = scmp.lt.s32.totalorder %s30, 1
        %s359 = scalar_select %p358, %s30, 1
        %s360 = scalar_lea.vmem %s2, %s359
        %p361 = pneg %p103
        %p362 = pneg %p100
        %p363 = pneg %p124
        %p364 = pneg %p121
        %p365 = pneg %p145
        %p366 = pneg %p142
        %p367 = pneg %p166
        %p368 = pneg %p163
        %p369 = pneg %p187
        %p370 = pneg %p184
        %p371 = pneg %p208
        %p372 = pneg %p205
        %p373 = pneg %p229
        %p374 = pneg %p226
        %p375 = pneg %p255
        %p376 = pneg %p252
        %s377 = sand.u32 %s242, 1
        %s378 = scalar_lea.sflag [#allocation4], %s377
        %s379 = sand.u32 %s242, 1
        %s380 = scalar_lea.vmem [#allocation3], %s379
        %p381 = pneg %p281
        %p382 = pneg %p278
        %s383 = sand.u32 %s268, 1
        %s384 = scalar_lea.sflag [#allocation6], %s383
        %s385 = sand.u32 %s268, 1
        %s386 = scalar_lea.vmem [#allocation5], %s385
        %s387 = smul.u32 2, %s30
        %p388 = scmp.lt.s32.totalorder %s387, 3
        %s389 = scalar_select %p388, %s387, 3
        %s390 = smul.addr %s389, 4
        %s391 = scalar_lea.vmem %s0, %s390
        %s392 = smul.u32 2, %s30
        %p393 = scmp.lt.s32.totalorder %s30, 1
        %s394 = scalar_select %p393, %s30, 1
        %s395 = scalar_lea.vmem %s1, %s394
        %p396 = scmp.lt.s32.totalorder %s30, 1
        %s397 = scalar_select %p396, %s30, 1
        %s398 = scalar_lea.vmem %s2, %s397
        %v400 = vld [vmem:[%s391] sm:$0xf]
        %v401 = vld [vmem:[%s391 + $0x4] sm:$0xf]
        %v402 = vld [vmem:[%s3] sm:$0xf]
        %v403 = vld [vmem:[%s3 + $0x4] sm:$0xf]
        %v404 = vld [vmem:[%s3 + $0x8] sm:$0xf]
        %v405 = vld [vmem:[%s3 + $0xc] sm:$0xf]
        %v406 = vld [vmem:[%s3 + $0x10] sm:$0xf]
        %v407 = vld [vmem:[%s3 + $0x14] sm:$0xf]
        %v408 = vld [vmem:[%s3 + $0x18] sm:$0xf]
        %v409 = vld [vmem:[%s3 + $0x1c] sm:$0xf]
        %v410 = vld [vmem:[%s3 + $0x20] sm:$0xf]
        %v411 = vld [vmem:[%s3 + $0x24] sm:$0xf]
        %v412 = vld [vmem:[%s3 + $0x28] sm:$0xf]
        %v413 = vld [vmem:[%s3 + $0x2c] sm:$0xf]
        %v414 = vld [vmem:[%s3 + $0x30] sm:$0xf]
        %v415 = vld [vmem:[%s3 + $0x34] sm:$0xf]
        %v416 = vld [vmem:[%s3 + $0x38] sm:$0xf]
        %v417 = vld [vmem:[%s3 + $0x3c] sm:$0xf]
        %v418 = vld [vmem:[%s4] sm:$0x1]
        %v420 = vlaneseq
        %v421 = vshrl.u32 %v420, 7
        %v422 = vsub.s32 0, %v421
        %v423 = vrot.slane %v418, %v422
        %v427 = vunpack.c.l.b16 %v400
        %v428 = vunpack.c.l.b16 %v401
        %v429 = vpack.c.b16 %v428, %v427
        %v447 = vunpack.c.l.b16 %v402
        %v448 = vunpack.c.l.b16 %v403
        %v449 = vunpack.c.l.b16 %v404
        %v450 = vunpack.c.l.b16 %v405
        %v451 = vunpack.c.l.b16 %v406
        %v452 = vunpack.c.l.b16 %v407
        %v453 = vunpack.c.l.b16 %v408
        %v454 = vunpack.c.l.b16 %v409
        %v455 = vunpack.c.l.b16 %v410
        %v456 = vunpack.c.l.b16 %v411
        %v457 = vunpack.c.l.b16 %v412
        %v458 = vunpack.c.l.b16 %v413
        %v459 = vunpack.c.l.b16 %v414
        %v460 = vunpack.c.l.b16 %v415
        %v461 = vunpack.c.l.b16 %v416
        %v462 = vunpack.c.l.b16 %v417
        %v463 = vpack.c.b16 %v448, %v447
        %v464 = vpack.c.b16 %v450, %v449
        %v465 = vpack.c.b16 %v452, %v451
        %v466 = vpack.c.b16 %v454, %v453
        %v467 = vpack.c.b16 %v456, %v455
        %v468 = vpack.c.b16 %v458, %v457
        %v469 = vpack.c.b16 %v460, %v459
        %v470 = vpack.c.b16 %v462, %v461
        %479 = vmatprep.subr.bf16.mxu0 0
        %480 = vmatpush1.bf16.msra.mxu0 %v463
        %481 = vmatprep.subr.bf16.mxu0 0
        %482 = vmatpush1.bf16.msra.mxu0 %v464
        %483 = vmatprep.subr.bf16.mxu0 0
        %484 = vmatpush1.bf16.msra.mxu0 %v465
        %485 = vmatprep.subr.bf16.mxu0 0
        %486 = vmatpush1.bf16.msra.mxu0 %v466
        %487 = vmatprep.subr.bf16.mxu0 0
        %488 = vmatpush1.bf16.msra.mxu0 %v467
        %489 = vmatprep.subr.bf16.mxu0 0
        %490 = vmatpush1.bf16.msra.mxu0 %v468
        %491 = vmatprep.subr.bf16.mxu0 0
        %492 = vmatpush1.bf16.msra.mxu0 %v469
        %493 = vmatprep.subr.bf16.mxu0 0
        %494 = vmatpush1.bf16.msra.mxu0 %v470
        %495 = vmatprep.subr.bf16.mxu0 0
        %496 = vmatpush1.bf16.msra.mxu0 0
        %497 = vmatprep.subr.bf16.mxu0 0
        %498 = vmatpush1.bf16.msra.mxu0 0
        %499 = vmatprep.subr.bf16.mxu0 0
        %500 = vmatpush1.bf16.msra.mxu0 0
        %501 = vmatprep.subr.bf16.mxu0 0
        %502 = vmatpush1.bf16.msra.mxu0 0
        %503 = vmatprep.subr.bf16.mxu0 0
        %504 = vmatpush1.bf16.msra.mxu0 0
        %505 = vmatprep.subr.bf16.mxu0 0
        %506 = vmatpush1.bf16.msra.mxu0 0
        %507 = vmatprep.subr.bf16.mxu0 0
        %508 = vmatpush1.bf16.msra.mxu0 0
        %509 = vmatprep.subr.bf16.mxu0 0
        %510 = vmatpush1.bf16.msra.mxu0 0
        %511 = vmatprep.mubr.bf16.mxu0 0
        %512 = vmatmul.mubr.bf16.gmra.mrb[0].mxu0 %v429
        %v513 = vpop.f32.mrb[0].mxu0
        %v514 = vadd.f32 %v423, %v513
        %v515 = vpop.f32.mrb[0].mxu0
        %v516 = vpop.f32.mrb[0].mxu0
        %v517 = vadd.f32 %v423, %v516
        %v518 = vpop.f32.mrb[0].mxu0
        %519 = vdwg.mxu0
        %v520 = vmax.f32 %v514, 0.0
        %v521 = vmax.f32 %v517, 0.0
        %v522 = vld [vmem:[%s395] sm:$0x1]
        %v523 = vld [vmem:[%s5] sm:$0xf]
        %v524 = vld [vmem:[%s5 + $0x4] sm:$0xf]
        %v525 = vld [vmem:[%s5 + $0x8] sm:$0xf]
        %v526 = vld [vmem:[%s5 + $0xc] sm:$0xf]
        %v527 = vld [vmem:[%s5 + $0x10] sm:$0xf]
        %v528 = vld [vmem:[%s5 + $0x14] sm:$0xf]
        %v529 = vld [vmem:[%s5 + $0x18] sm:$0xf]
        %v530 = vld [vmem:[%s5 + $0x1c] sm:$0xf]
        %v531 = vld [vmem:[%s5 + $0x20] sm:$0xf]
        %v532 = vld [vmem:[%s5 + $0x24] sm:$0xf]
        %v533 = vld [vmem:[%s5 + $0x28] sm:$0xf]
        %v534 = vld [vmem:[%s5 + $0x2c] sm:$0xf]
        %v535 = vld [vmem:[%s5 + $0x30] sm:$0xf]
        %v536 = vld [vmem:[%s5 + $0x34] sm:$0xf]
        %v537 = vld [vmem:[%s5 + $0x38] sm:$0xf]
        %v538 = vld [vmem:[%s5 + $0x3c] sm:$0xf]
        %v539 = vld [vmem:[%s6] sm:$0x1]
        %v556 = vunpack.c.l.b16 %v523
        %v557 = vunpack.c.l.b16 %v524
        %v558 = vunpack.c.l.b16 %v525
        %v559 = vunpack.c.l.b16 %v526
        %v560 = vunpack.c.l.b16 %v527
        %v561 = vunpack.c.l.b16 %v528
        %v562 = vunpack.c.l.b16 %v529
        %v563 = vunpack.c.l.b16 %v530
        %v564 = vunpack.c.l.b16 %v531
        %v565 = vunpack.c.l.b16 %v532
        %v566 = vunpack.c.l.b16 %v533
        %v567 = vunpack.c.l.b16 %v534
        %v568 = vunpack.c.l.b16 %v535
        %v569 = vunpack.c.l.b16 %v536
        %v570 = vunpack.c.l.b16 %v537
        %v571 = vunpack.c.l.b16 %v538
        %v572 = vpack.c.b16 %v557, %v556
        %v573 = vpack.c.b16 %v559, %v558
        %v574 = vpack.c.b16 %v561, %v560
        %v575 = vpack.c.b16 %v563, %v562
        %v576 = vpack.c.b16 %v565, %v564
        %v577 = vpack.c.b16 %v567, %v566
        %v578 = vpack.c.b16 %v569, %v568
        %v579 = vpack.c.b16 %v571, %v570
        %588 = vmatprep.subr.bf16.mxu0 0
        %589 = vmatpush1.bf16.msra.mxu0 %v572
        %590 = vmatprep.subr.bf16.mxu0 0
        %591 = vmatpush1.bf16.msra.mxu0 %v573
        %592 = vmatprep.subr.bf16.mxu0 0
        %593 = vmatpush1.bf16.msra.mxu0 %v574
        %594 = vmatprep.subr.bf16.mxu0 0
        %595 = vmatpush1.bf16.msra.mxu0 %v575
        %596 = vmatprep.subr.bf16.mxu0 0
        %597 = vmatpush1.bf16.msra.mxu0 %v576
        %598 = vmatprep.subr.bf16.mxu0 0
        %599 = vmatpush1.bf16.msra.mxu0 %v577
        %600 = vmatprep.subr.bf16.mxu0 0
        %601 = vmatpush1.bf16.msra.mxu0 %v578
        %602 = vmatprep.subr.bf16.mxu0 0
        %603 = vmatpush1.bf16.msra.mxu0 %v579
        %604 = vmatprep.subr.bf16.mxu0 0
        %605 = vmatpush1.bf16.msra.mxu0 0
        %606 = vmatprep.subr.bf16.mxu0 0
        %607 = vmatpush1.bf16.msra.mxu0 0
        %608 = vmatprep.subr.bf16.mxu0 0
        %609 = vmatpush1.bf16.msra.mxu0 0
        %610 = vmatprep.subr.bf16.mxu0 0
        %611 = vmatpush1.bf16.msra.mxu0 0
        %612 = vmatprep.subr.bf16.mxu0 0
        %613 = vmatpush1.bf16.msra.mxu0 0
        %614 = vmatprep.subr.bf16.mxu0 0
        %615 = vmatpush1.bf16.msra.mxu0 0
        %616 = vmatprep.subr.bf16.mxu0 0
        %617 = vmatpush1.bf16.msra.mxu0 0
        %618 = vmatprep.subr.bf16.mxu0 0
        %619 = vmatpush1.bf16.msra.mxu0 0
        %620 = vmatprep.mubr.bf16.mxu0 0
        %621 = vmatmul.mubr.bf16.gmra.mrb[0].mxu0 %v522
        %v622 = vpop.f32.mrb[0].mxu0
        %v623 = vadd.f32 %v539, %v622
        %v624 = vpop.f32.mrb[0].mxu0
        %v625 = vpop.f32.mrb[0].mxu0
        %v626 = vpop.f32.mrb[0].mxu0
        %627 = vdwg.mxu0
        %v628 = vmax.f32 %v623, 0.0
        %v629 = vld [vmem:[%s7] sm:$0x1]
        %v630 = vmul.f32 %v628, %v629
        %v631 = vld [vmem:[#allocation2] sm:$0x1]
        %633 = vset.pattern.permute.xlu0 0
        %634 = vperm.xlu0 %633, %v631
        %v635 = vpop.permute.xlu0 %634
        %v637 = vlaneseq
        %v638 = vshrl.u32 %v637, 7
        %v639 = vsub.s32 0, %v638
        %v640 = vrot.slane %v635, %v639
        %641 = vmatprep.subr.mxu0 0.0
        %642 = vmatpush1.xpose.msra.mxu0 %v520
        %643 = vmatprep.subr.mxu0 0.0
        %644 = vmatpush1.xpose.msra.mxu0 %v521
        %645 = vmatprep.subr.mxu0 0.0
        %646 = vmatpush1.xpose.msra.mxu0 0.0
        %647 = vmatprep.subr.mxu0 0.0
        %648 = vmatpush1.xpose.msra.mxu0 0.0
        %649 = vmatprep.subr.mxu0 0.0
        %650 = vmatpush1.xpose.msra.mxu0 0.0
        %651 = vmatprep.subr.mxu0 0.0
        %652 = vmatpush1.xpose.msra.mxu0 0.0
        %653 = vmatprep.subr.mxu0 0.0
        %654 = vmatpush1.xpose.msra.mxu0 0.0
        %655 = vmatprep.subr.mxu0 0.0
        %656 = vmatpush1.xpose.msra.mxu0 0.0
        %657 = vmatprep.subr.mxu0 0.0
        %658 = vmatpush1.xpose.msra.mxu0 0.0
        %659 = vmatprep.subr.mxu0 0.0
        %660 = vmatpush1.xpose.msra.mxu0 0.0
        %661 = vmatprep.subr.mxu0 0.0
        %662 = vmatpush1.xpose.msra.mxu0 0.0
        %663 = vmatprep.subr.mxu0 0.0
        %664 = vmatpush1.xpose.msra.mxu0 0.0
        %665 = vmatprep.subr.mxu0 0.0
        %666 = vmatpush1.xpose.msra.mxu0 0.0
        %667 = vmatprep.subr.mxu0 0.0
        %668 = vmatpush1.xpose.msra.mxu0 0.0
        %669 = vmatprep.subr.mxu0 0.0
        %670 = vmatpush1.xpose.msra.mxu0 0.0
        %671 = vmatprep.subr.mxu0 0.0
        %672 = vmatpush1.xpose.msra.mxu0 0.0
        %673 = vmatprep.subr.mxu0 0.0
        %674 = vmatpush1.xpose.msra.mxu0 0.0
        %675 = vmatprep.subr.mxu0 0.0
        %676 = vmatpush1.xpose.msra.mxu0 0.0
        %677 = vmatprep.subr.mxu0 0.0
        %678 = vmatpush1.xpose.msra.mxu0 0.0
        %679 = vmatprep.subr.mxu0 0.0
        %680 = vmatpush1.xpose.msra.mxu0 0.0
        %681 = vmatprep.subr.mxu0 0.0
        %682 = vmatpush1.xpose.msra.mxu0 0.0
        %683 = vmatprep.subr.mxu0 0.0
        %684 = vmatpush1.xpose.msra.mxu0 0.0
        %685 = vmatprep.subr.mxu0 0.0
        %686 = vmatpush1.xpose.msra.mxu0 0.0
        %687 = vmatprep.subr.mxu0 0.0
        %688 = vmatpush1.xpose.msra.mxu0 0.0
        %689 = vmatprep.subr.mxu0 0.0
        %690 = vmatpush1.xpose.msra.mxu0 0.0
        %691 = vmatprep.subr.mxu0 0.0
        %692 = vmatpush1.xpose.msra.mxu0 0.0
        %693 = vmatprep.subr.mxu0 0.0
        %694 = vmatpush1.xpose.msra.mxu0 0.0
        %695 = vmatprep.subr.mxu0 0.0
        %696 = vmatpush1.xpose.msra.mxu0 0.0
        %697 = vmatprep.subr.mxu0 0.0
        %698 = vmatpush1.xpose.msra.mxu0 0.0
        %699 = vmatprep.subr.mxu0 0.0
        %700 = vmatpush1.xpose.msra.mxu0 0.0
        %701 = vmatprep.subr.mxu0 0.0
        %702 = vmatpush1.xpose.msra.mxu0 0.0
        %703 = vmatprep.subr.mxu0 0.0
        %704 = vmatpush1.xpose.msra.mxu0 0.0
        %705 = vmatprep.mubr.f32.mxu0 0.0
        %706 = vmatmul.mubr.f32.gmra.mrb[0].mxu0 %v630
        %v707 = vpop.f32.mrb[0].mxu0
        %v708 = vadd.f32 %v640, %v707
        %v709 = vpop.f32.mrb[0].mxu0
        %710 = vdwg.mxu0
        %v711 = vld [vmem:[%s398] sm:$0x1]
        %v712 = vmul.f32 %v708, %v711
        %v713 = vlaneseq
        %v714 = vand.u32 %v713, 127
        %vm715 = vcmp.lt.s32.totalorder %v714, 16
        %v716 = vsel %vm715, %v712, -1e+30
        %vm717 = vcmask 122880
        %v718 = vsel %vm717, %v716, -inf
        %719 = vmax.xlane.f32.xlu0 %v718
        %v720 = vpop.xlane.xlu0 %719
        %v721 = vsub.f32 %v716, %v720
        %v722 = vmul.f32 %v721, 1.442695
        %v723 = vpow.pop %v722
        %v724 = vsel %vm717, %v723, 0.0
        %725 = vadd.xlane.f32.xlu0 %v724
        %v726 = vpop.xlane.xlu0 %725
        %v727 = vrcp.pop %v726
        %v728 = vmul.f32 %v723, %v727
        %729 = vst.msk [vmem:[%s380] sm:$0x1] %vm717, %v728
        %730 = vst.msk [vmem:[%s386] sm:$0x1] %vm717, %v712
        %s731 = sand.u32 %s242, 1
        %s732 = scalar_lea.sflag [#allocation4], %s731
        %s733 = sand.u32 %s242, 1
        %s734 = scalar_lea.vmem [#allocation3], %s733
        %s735 = sand.u32 %s268, 1
        %s736 = scalar_lea.sflag [#allocation6], %s735
        %s737 = sand.u32 %s268, 1
        %s738 = scalar_lea.vmem [#allocation5], %s737
        // Predicated region
        $region57: #{attention_forward.1} parent=55 // pred_check
          %p739 = pneg %p252
        $region58: #{attention_forward.1} parent=55 // pred_check_branch
          %741 = sbr.rel (%p739) target = $region60
        $region59: #{attention_forward.1} parent=55 // pred_region
          %s743 = ssub.s32 16, 16
          %744 = vsyncadd %s732, %s743
          %s745 = smul.addr %s30, 16
          %s746 = scalar_lea.hbm %s9, %s745
          %s748 = sshll.u32 %s734, 4
          %s749 = int_to_ptr.vmem [resolvable:$true] %s748
          %751 = dma.vmem_to_hbm [thread:$0]  %s749, 16, %s746, %s732
        $region60: #{attention_forward.1} parent=55 // pred_fallthru
          _
        // Predicated region
        $region61: #{attention_forward.1} parent=55 // pred_check
          %p752 = pneg %p278
        $region62: #{attention_forward.1} parent=55 // pred_check_branch
          %754 = sbr.rel (%p752) target = $region64
        $region63: #{attention_forward.1} parent=55 // pred_region
          %s756 = ssub.s32 16, 16
          %757 = vsyncadd %s736, %s756
          %s758 = smul.addr %s30, 16
          %s759 = scalar_lea.hbm %s10, %s758
          %s761 = sshll.u32 %s738, 4
          %s762 = int_to_ptr.vmem [resolvable:$true] %s761
          %764 = dma.vmem_to_hbm [thread:$0]  %s762, 16, %s759, %s736
        $region64: #{attention_forward.1} parent=55 // pred_fallthru
          _
      $region56: #{attention_forward.1} parent=5 // pred_fallthru
        _
      %p765 = scmp.le.s32.totalorder 2, %s25
      // Predicated region
      $region65: #{attention_forward.1} parent=5 // pred_check
        %p766 = pneg %p765
      $region66: #{attention_forward.1} parent=5 // pred_check_branch
        %768 = sbr.rel (%p766) target = $region68
      $region67: #{attention_forward.1} parent=5 // pred_region
        %s769 = ssub.s32 %s25, 2
        // Predicated region
        $region69: #{attention_forward.1} parent=67 // pred_check
          %p770 = pneg %p258
        $region70: #{attention_forward.1} parent=67 // pred_check_branch
          %772 = sbr.rel (%p770) target = $region72
        $region71: #{attention_forward.1} parent=67 // pred_region
          %s773 = sand.u32 %s243, 1
          %s774 = scalar_lea.sflag [#allocation4], %s773
          %s775 = sand.u32 %s243, 1
          %s776 = scalar_lea.vmem [#allocation3], %s775
          %777 = dma.done %s774, 16
        $region72: #{attention_forward.1} parent=67 // pred_fallthru
          _
        // Predicated region
        $region73: #{attention_forward.1} parent=67 // pred_check
          %p778 = pneg %p284
        $region74: #{attention_forward.1} parent=67 // pred_check_branch
          %780 = sbr.rel (%p778) target = $region76
        $region75: #{attention_forward.1} parent=67 // pred_region
          %s781 = sand.u32 %s269, 1
          %s782 = scalar_lea.sflag [#allocation6], %s781
          %s783 = sand.u32 %s269, 1
          %s784 = scalar_lea.vmem [#allocation5], %s783
          %785 = dma.done %s782, 16
        $region76: #{attention_forward.1} parent=67 // pred_fallthru
          _
      $region68: #{attention_forward.1} parent=5 // pred_fallthru
        _
    $region6: #{attention_forward.1} parent=1 // loop_footer
      %s29 = sadd.s32 1, %s25
    $region7: #{attention_forward.1} parent=1 // loop_footer_branch
      %24 = sbr.rel target = $region3
    $region8: #{attention_forward.1} parent=1 // loop_exit
      _
    %786 = vsyncpa [#allocation4], 1
    %s787 = scalar_lea.sflag [#allocation4], 1
    %788 = vsyncpa %s787, 1
    %789 = vsyncpa [#allocation6], 1
    %s790 = scalar_lea.sflag [#allocation6], 1
    %791 = vsyncpa %s790, 1

</llo_original>
